<compile_context>
chip_gen: v7x
topology: tpu7x:2x2x1
jax: 0.10.0
libtpu: 0.0.40
codegen_flags: <defaults>
</compile_context>

<pallas_src>
import jax
import jax.numpy as jnp
from jax.experimental import pallas as pl
from jax.experimental.pallas import tpu as pltpu


def _route_dma_kernel(x2_hbm, x1_hbm, out_hbm, sem):
    # All refs live in HBM. x2_hbm: (N, D2[, HW]), x1_hbm: (N, D1[, HW]),
    # out_hbm: (N, D2+D1[, HW]). Two whole-batch HBM->HBM DMAs: contiguous
    # sources into 2-D strided destinations. Start both so they share the HBM
    # pipe, then wait on both (start+wait on the same descriptor objects, so
    # completion counts always match the issued transfers).
    d2 = x2_hbm.shape[1]
    d1 = x1_hbm.shape[1]
    cp2 = pltpu.make_async_copy(x2_hbm, out_hbm.at[:, pl.ds(0, d2)], sem.at[0])
    cp1 = pltpu.make_async_copy(x1_hbm, out_hbm.at[:, pl.ds(d2, d1)], sem.at[1])
    cp2.start()
    cp1.start()
    cp2.wait()
    cp1.wait()


def _small_bytes_threshold():
    """Below this total size, XLA's fused concat beats a standalone copy kernel.

    The crossover scales with HBM bandwidth (fixed kernel overhead moves more
    bytes per microsecond on faster chips), so scale it by generation.
    """
    try:
        kind = jax.devices()[0].device_kind.lower()
    except Exception:
        return 2 * 1024 * 1024
    if "v5" in kind:
        return 512 * 1024      # ~0.8 TB/s
    if "v6" in kind:
        return 2 * 1024 * 1024  # ~1.4 TB/s
    return 4 * 1024 * 1024      # v7x and newer (~3.2 TB/s)


def route(x1, x2, *, force_pallas=False):
    """Equivalent of Route.forward(x1, x2) -> torch.cat((x2, x1), dim=1) (NCHW)."""
    assert x1.ndim == 4 and x2.ndim == 4
    assert x1.shape[0] == x2.shape[0], "batch mismatch"
    assert x1.shape[2:] == x2.shape[2:], "spatial mismatch"
    assert x1.dtype == x2.dtype, "dtype mismatch"

    n, c1, h, w = x1.shape
    c2 = x2.shape[1]
    c_out = c1 + c2
    hw = h * w
    itemsize = x1.dtype.itemsize

    total_bytes = (x1.size + x2.size) * itemsize
    if not force_pallas and total_bytes < _small_bytes_threshold():
        return jnp.concatenate((x2, x1), axis=1)

    # Pick the flattening whose concat-split offset is tile-aligned.
    # Free reshapes for contiguous NCHW; both views keep every DMA a simple
    # contiguous-source / strided-destination slab copy.
    sublane_tile = max(1, 32 // itemsize)  # 8 f32 / 16 bf16 / 32 int8
    if hw % 128 == 0:
        # (N, C*HW): split at lane offset c2*HW, a multiple of 128 lanes ->
        # unmasked full-rate DMA bursts on every generation.
        x1_v = x1.reshape(n, c1 * hw)
        x2_v = x2.reshape(n, c2 * hw)
        out_view_shape = (n, c_out * hw)
    else:
        # (N, C, HW): split at channel c2 (aligned when c2 % sublane_tile == 0;
        # otherwise the DMA engine falls back to partial-tile transfers —
        # still correct, just slower).
        # TODO(synk): pad-to-tile staging for the doubly-misaligned case.
        del sublane_tile
        x1_v = x1.reshape(n, c1, hw)
        x2_v = x2.reshape(n, c2, hw)
        out_view_shape = (n, c_out, hw)

    out = pl.pallas_call(
        _route_dma_kernel,
        out_shape=jax.ShapeDtypeStruct(out_view_shape, x1.dtype),
        in_specs=[
            pl.BlockSpec(memory_space=pl.ANY),  # x2 stays in HBM
            pl.BlockSpec(memory_space=pl.ANY),  # x1 stays in HBM
        ],
        out_specs=pl.BlockSpec(memory_space=pl.ANY),  # out in HBM
        scratch_shapes=[pltpu.SemaphoreType.DMA((2,))],
        # Pure memory op of known size: let XLA overlap neighbors around it.
        cost_estimate=pl.CostEstimate(
            flops=0, transcendentals=0, bytes_accessed=2 * total_bytes),
    )(x2_v, x1_v)

    return out.reshape(n, c_out, h, w)


if __name__ == "__main__":
    key = jax.random.PRNGKey(0)
    k1, k2, k3, k4 = jax.random.split(key, 4)

    # x1: previous output, x2: current output (NCHW).
    x1 = jax.random.normal(k1, (2, 4, 16, 16), dtype=jnp.float32)
    x2 = jax.random.normal(k2, (2, 6, 16, 16), dtype=jnp.float32)

    # Force the Pallas DMA path even at this tiny test size (lane-aligned view:
    # HW = 256 is a multiple of 128).
    out = route(x1, x2, force_pallas=True)
    out = jax.block_until_ready(out)

    ref = jnp.concatenate((x2, x1), axis=1)
    assert out.shape == (2, 10, 16, 16)
    assert jnp.array_equal(out, ref)

    # Exercise the (N, C, HW) fallback view (HW = 144, not a multiple of 128;
    # channel split c2 = 8 is sublane-aligned for f32).
    y1 = jax.random.normal(k3, (2, 8, 12, 12), dtype=jnp.float32)
    y2 = jax.random.normal(k4, (2, 8, 12, 12), dtype=jnp.float32)
    out_b = jax.block_until_ready(route(y1, y2, force_pallas=True))
    ref_b = jnp.concatenate((y2, y1), axis=1)
    assert out_b.shape == (2, 16, 12, 12)
    assert jnp.array_equal(out_b, ref_b)

    # The small-tensor fallback path (XLA concat) must agree as well.
    out_auto = jax.block_until_ready(route(x1, x2))
    assert jnp.array_equal(out_auto, ref)

    print("KERNEL_OK")
</pallas_src>

<mosaic_0001>
module attributes {stable_mosaic.version = 11 : i64} {
  func.func @_route_dma_kernel(%arg0: memref<2x1536xf32, #tpu.memory_space<any>>, %arg1: memref<2x1024xf32, #tpu.memory_space<any>>, %arg2: memref<2x2560xf32, #tpu.memory_space<any>>, %arg3: memref<2x!tpu.dma_semaphore, #tpu.memory_space<semaphore_mem>>) attributes {dimension_semantics = [], scalar_prefetch = 0 : i64, scratch_operands = 1 : i64, tpu.core_type = #tpu.core_type<tc>} {
    %c0_i32 = arith.constant 0 : i32
    %c0_i32_0 = arith.constant 0 : i32
    %c0_i32_1 = arith.constant 0 : i32
    %0 = tpu.memref_slice %arg2[%c0_i32_0, %c0_i32_1] : memref<2x2560xf32, #tpu.memory_space<any>> -> memref<2x1536xf32, #tpu.memory_space<any>>
    %1 = tpu.memref_slice %arg3[%c0_i32] : memref<2x!tpu.dma_semaphore, #tpu.memory_space<semaphore_mem>> -> memref<1x!tpu.dma_semaphore, #tpu.memory_space<semaphore_mem>>
    %2 = tpu.memref_squeeze %1 : memref<1x!tpu.dma_semaphore, #tpu.memory_space<semaphore_mem>> -> memref<!tpu.dma_semaphore, #tpu.memory_space<semaphore_mem>>
    tpu.enqueue_dma source(%arg0 : memref<2x1536xf32, #tpu.memory_space<any>>) target(%0 : memref<2x1536xf32, #tpu.memory_space<any>>) target_semaphore(%2 : memref<!tpu.dma_semaphore, #tpu.memory_space<semaphore_mem>>)
    %c1_i32 = arith.constant 1 : i32
    %c0_i32_2 = arith.constant 0 : i32
    %c1536_i32 = arith.constant 1536 : i32
    %3 = tpu.memref_slice %arg2[%c0_i32_2, %c1536_i32] : memref<2x2560xf32, #tpu.memory_space<any>> -> memref<2x1024xf32, #tpu.memory_space<any>>
    %4 = tpu.memref_slice %arg3[%c1_i32] : memref<2x!tpu.dma_semaphore, #tpu.memory_space<semaphore_mem>> -> memref<1x!tpu.dma_semaphore, #tpu.memory_space<semaphore_mem>>
    %5 = tpu.memref_squeeze %4 : memref<1x!tpu.dma_semaphore, #tpu.memory_space<semaphore_mem>> -> memref<!tpu.dma_semaphore, #tpu.memory_space<semaphore_mem>>
    tpu.enqueue_dma source(%arg1 : memref<2x1024xf32, #tpu.memory_space<any>>) target(%3 : memref<2x1024xf32, #tpu.memory_space<any>>) target_semaphore(%5 : memref<!tpu.dma_semaphore, #tpu.memory_space<semaphore_mem>>)
    %c0_i32_3 = arith.constant 0 : i32
    %c0_i32_4 = arith.constant 0 : i32
    %c0_i32_5 = arith.constant 0 : i32
    %6 = tpu.memref_slice %arg2[%c0_i32_4, %c0_i32_5] : memref<2x2560xf32, #tpu.memory_space<any>> -> memref<2x1536xf32, #tpu.memory_space<any>>
    %7 = tpu.memref_slice %arg3[%c0_i32_3] : memref<2x!tpu.dma_semaphore, #tpu.memory_space<semaphore_mem>> -> memref<1x!tpu.dma_semaphore, #tpu.memory_space<semaphore_mem>>
    %8 = tpu.memref_squeeze %7 : memref<1x!tpu.dma_semaphore, #tpu.memory_space<semaphore_mem>> -> memref<!tpu.dma_semaphore, #tpu.memory_space<semaphore_mem>>
    tpu.wait_dma2 semaphore(%8 : memref<!tpu.dma_semaphore, #tpu.memory_space<semaphore_mem>>) src(%arg0 : memref<2x1536xf32, #tpu.memory_space<any>>) dst(%6 : memref<2x1536xf32, #tpu.memory_space<any>>)
    %c1_i32_6 = arith.constant 1 : i32
    %c0_i32_7 = arith.constant 0 : i32
    %c1536_i32_8 = arith.constant 1536 : i32
    %9 = tpu.memref_slice %arg2[%c0_i32_7, %c1536_i32_8] : memref<2x2560xf32, #tpu.memory_space<any>> -> memref<2x1024xf32, #tpu.memory_space<any>>
    %10 = tpu.memref_slice %arg3[%c1_i32_6] : memref<2x!tpu.dma_semaphore, #tpu.memory_space<semaphore_mem>> -> memref<1x!tpu.dma_semaphore, #tpu.memory_space<semaphore_mem>>
    %11 = tpu.memref_squeeze %10 : memref<1x!tpu.dma_semaphore, #tpu.memory_space<semaphore_mem>> -> memref<!tpu.dma_semaphore, #tpu.memory_space<semaphore_mem>>
    tpu.wait_dma2 semaphore(%11 : memref<!tpu.dma_semaphore, #tpu.memory_space<semaphore_mem>>) src(%arg1 : memref<2x1024xf32, #tpu.memory_space<any>>) dst(%9 : memref<2x1024xf32, #tpu.memory_space<any>>)
    return
  }
}

</mosaic_0001>

<llo_original>
// kernel: tpu_custom_call.1
$region0: #{tpu_custom_call.1}
  #allocation0 [shape = 'u32[]', space=smem, size = 0x4, offset = 0x4, fixed_abs, tag = 'smem constant byte address 0x4 - core index']
  #allocation1 [shape = 'u32[144,128]{1,0:T(1,128)}', space=vmem, size = 0x12000, scoped, tag = 'internal scratch']
  #allocation2 [shape = 's32[2]{0}', space=sflag, size = 0x8, scoped, tag = 'scratch operand']
  #allocation3 [shape = 's32[]', space=sflag, size = 0x4, offset = 0, fixed_abs, tag = 'sflag constant byte address 0x0 - dummy sync flag']
  #allocation4 [shape = 'u32[0]{0}', space=smem, size = 0, offset = 0, fixed_abs, tag = 'smem constant byte address 0x0 - null']
  #allocation5 [shape = 's32[]', space=sflag, size = 0x4, offset = 0, fixed_abs, tag = 'sflag constant byte address 0x0 - dummy sync flag']
  #allocation6 [shape = 'u32[0]{0}', space=smem, size = 0, offset = 0, fixed_abs, tag = 'smem constant byte address 0x0 - null']
  %s0 = inlined_call_operand.hbm [shape: f32[2,1536], index: 0, kind: input, shape index: {}]
  %s1 = inlined_call_operand.hbm [shape: f32[2,1024], index: 1, kind: input, shape index: {}]
  %s2 = inlined_call_operand.hbm [shape: f32[2,2560], index: 2, kind: output, shape index: {}]
  %s3 = sld [smem:[#allocation0]]
  $region2: #{tpu_custom_call.1} parent=0
    _
  %s5 = ssub.s32 1, %s3
  %s6 = scalar_select 0, %s5, %s3
  %s8 = sshll.u32 1, 14
  %s9 = sxor.u32 4294967295, %s8
  %s12 = sshll.u32 3, 24
  %s13 = sxor.u32 4294967295, %s12
  %s14 = sand.u32 0, %s13
  %s16 = sor.u32 %s14, 0
  %19 = dma.general %s0, 384, %s2, [#allocation2], [#allocation3], [#allocation4], %s16, 0
  %s20 = scalar_lea.hbm %s2, 384
  %s21 = scalar_lea.sflag [#allocation2], 1
  %s23 = sshll.u32 1, 14
  %s24 = sxor.u32 4294967295, %s23
  %s27 = sshll.u32 3, 24
  %s28 = sxor.u32 4294967295, %s27
  %s29 = sand.u32 0, %s28
  %s31 = sor.u32 %s29, 0
  %34 = dma.general %s1, 256, %s20, %s21, [#allocation5], [#allocation6], %s31, 0
  %s35 = smul.u32 2, 1
  %s36 = smul.u32 %s35, 12
  %s37 = sshll.u32 %s36, 4
  %38 = dma.done [#allocation2], %s37
  %s39 = smul.u32 %s35, 8
  %s40 = sshll.u32 %s39, 4
  %41 = dma.done %s21, %s40
  %42 = vsyncmov [#allocation2]
  %s43 = vpop.sfrf %42
  %p44 = scmp.eq.s32.totalorder %s43, 0
  %p45 = pneg %p44
  %47 = shalt.err (%p45)
  %s48 = scalar_lea.sflag [#allocation2], 1
  %49 = vsyncmov %s48
  %s50 = vpop.sfrf %49
  %p51 = scmp.eq.s32.totalorder %s50, 0
  %p52 = pneg %p51
  %54 = shalt.err (%p52)

</llo_original>
